<compile_context>
chip_gen: v7x
topology: tpu7x:2x2x1
jax: 0.10.0
libtpu: 0.0.40
codegen_flags: <defaults>
</compile_context>

<pallas_src>
import math

import jax
import jax.numpy as jnp
from jax.experimental import pallas as pl
from jax.experimental.pallas import tpu as pltpu


def _round_up(x, m):
    return ((x + m - 1) // m) * m


def euler_kernel(scalar_ref, state_ref, noise_ref, w_ref, b_ref,
                 new_state_ref, drift_ref, dw_ref):
    dt = scalar_ref[0]        # Delta t          (SMEM scalar)
    sqrt_dt = scalar_ref[1]   # sqrt(Delta t)    (precomputed on host)

    x = state_ref[...]                                    # (tm, D)

    # drift_fn(x) = tanh(x @ W + b): MXU matmul (bf16 operands when W is bf16),
    # f32 accumulation, tanh on the EUP, bias/update arithmetic in f32.
    xm = x.astype(w_ref.dtype)
    drift_f32 = jnp.tanh(
        jnp.dot(xm, w_ref[...], preferred_element_type=jnp.float32)
        + b_ref[...].astype(jnp.float32)
    )
    drift = drift_f32.astype(drift_ref.dtype)

    # dW = N(0, 1) * sqrt(dt)
    dW = (noise_ref[...] * sqrt_dt).astype(dw_ref.dtype)

    # Euler-Maruyama update: X_{t+1} = X_t + dW + v(X_t) * dt
    new_state_ref[...] = (x + dW + drift_f32 * dt).astype(new_state_ref.dtype)
    drift_ref[...] = drift
    dw_ref[...] = dW


def euler_step(state, noise, w, b, dt, *, tm=None, use_bf16_matmul=None):
    """One Euler-Maruyama step.  Returns (new_state, drift, dW)."""
    B, D = state.shape
    itemsize = state.dtype.itemsize

    # bf16 matmul operands pay off once the kernel becomes compute-bound
    # (large D) on v6e/v7x; for small D it is HBM-bound so stay in f32 and
    # keep the result exactly matching the f32 reference.
    if use_bf16_matmul is None:
        use_bf16_matmul = D >= 512
    w_in = w.astype(jnp.bfloat16) if use_bf16_matmul else w

    w_bytes = w_in.size * w_in.dtype.itemsize
    b_bytes = b.size * b.dtype.itemsize

    # --- tile selection: biggest tile that fits the scoped-VMEM budget -------
    if tm is None:
        tm = min(512, _round_up(B, 8))
        # 5 streamed (tm, D) arrays double-buffered; W/b single-buffered.
        while tm > 8 and (5 * 2 * tm * D * itemsize + w_bytes + b_bytes) > 12 * 1024 * 1024:
            tm //= 2
        # keep >= 2 grid points so v7x can shard the batch over both TCs
        if B > 8 and pl.cdiv(B, tm) < 2:
            tm = max(8, _round_up(pl.cdiv(B, 2), 8))
    assert tm % 8 == 0

    # pad batch to a multiple of the tile (handles arbitrary B)
    B_pad = _round_up(B, tm)
    if B_pad != B:
        pad = ((0, B_pad - B), (0, 0))
        state_p = jnp.pad(state, pad)
        noise_p = jnp.pad(noise, pad)
    else:
        state_p, noise_p = state, noise

    # dt and sqrt(dt) precomputed on the host, read from SMEM in the kernel
    scalars = jnp.asarray([dt, math.sqrt(dt)], dtype=jnp.float32)

    grid = (B_pad // tm,)
    in_specs = [
        pl.BlockSpec(memory_space=pltpu.MemorySpace.SMEM),        # [dt, sqrt(dt)]
        pl.BlockSpec((tm, D), lambda i: (i, 0)),                  # state tile
        pl.BlockSpec((tm, D), lambda i: (i, 0)),                  # noise tile
        pl.BlockSpec((D, D), lambda i: (0, 0),
                     pipeline_mode=pl.Buffered(1)),               # W (resident)
        pl.BlockSpec((1, D), lambda i: (0, 0),
                     pipeline_mode=pl.Buffered(1)),               # b (resident)
    ]
    out_specs = [
        pl.BlockSpec((tm, D), lambda i: (i, 0)),                  # new state
        pl.BlockSpec((tm, D), lambda i: (i, 0)),                  # drift
        pl.BlockSpec((tm, D), lambda i: (i, 0)),                  # dW
    ]
    out_shape = tuple(
        jax.ShapeDtypeStruct((B_pad, D), state.dtype) for _ in range(3)
    )

    # raise the scoped-VMEM limit only if this configuration needs it
    vmem_needed = 5 * 2 * tm * D * itemsize + w_bytes + b_bytes + (1 << 20)
    vmem_limit = (int(min(vmem_needed, 96 * 1024 * 1024))
                  if vmem_needed > 16 * 1024 * 1024 else None)

    cost = pl.CostEstimate(
        flops=2 * B_pad * D * D + 4 * B_pad * D,
        transcendentals=B_pad * D,
        bytes_accessed=5 * B_pad * D * itemsize + w_bytes + b_bytes,
    )

    new_state, drift, dW = pl.pallas_call(
        euler_kernel,
        out_shape=out_shape,
        grid_spec=pltpu.PrefetchScalarGridSpec(
            num_scalar_prefetch=0,
            grid=grid,
            in_specs=in_specs,
            out_specs=out_specs,
        ),
        compiler_params=pltpu.CompilerParams(
            dimension_semantics=("parallel",),
            vmem_limit_bytes=vmem_limit,
        ),
        cost_estimate=cost,
    )(scalars, state_p, noise_p, w_in, b)

    if B_pad != B:
        new_state, drift, dW = new_state[:B], drift[:B], dW[:B]
    return new_state, drift, dW


def euler_step_ref(state, noise, w, b, dt):
    drift = jnp.tanh(state @ w + b)
    dW = noise * jnp.asarray(math.sqrt(dt), dtype=jnp.float32)
    return state + dW + drift * jnp.float32(dt), drift, dW


if __name__ == "__main__":
    B, D = 16, 128
    dt = 0.01

    key = jax.random.PRNGKey(0)
    k_state, k_noise, k_w = jax.random.split(key, 3)

    state = jax.random.normal(k_state, (B, D), dtype=jnp.float32)
    noise = jax.random.normal(k_noise, (B, D), dtype=jnp.float32)  # randn_like
    w = jax.random.normal(k_w, (D, D), dtype=jnp.float32) / math.sqrt(D)
    b = jnp.zeros((1, D), dtype=jnp.float32)

    new_state, drift, dW = euler_step(state, noise, w, b, dt)
    jax.block_until_ready((new_state, drift, dW))

    # correctness check against pure-JAX reference
    ref_state, ref_drift, ref_dW = euler_step_ref(state, noise, w, b, dt)
    assert jnp.allclose(new_state, ref_state, atol=1e-5, rtol=1e-5)
    assert jnp.allclose(drift, ref_drift, atol=1e-5, rtol=1e-5)
    assert jnp.allclose(dW, ref_dW, atol=1e-6, rtol=1e-6)

    print("KERNEL_OK")
</pallas_src>

<mosaic_0001>
module attributes {stable_mosaic.version = 11 : i64} {
  func.func @euler_kernel(%arg0: i32, %arg1: memref<2xf32, #tpu.memory_space<smem>>, %arg2: memref<8x128xf32, #tpu.memory_space<vmem>>, %arg3: memref<8x128xf32, #tpu.memory_space<vmem>>, %arg4: memref<128x128xf32, #tpu.memory_space<vmem>>, %arg5: memref<1x128xf32, #tpu.memory_space<vmem>>, %arg6: memref<8x128xf32, #tpu.memory_space<vmem>>, %arg7: memref<8x128xf32, #tpu.memory_space<vmem>>, %arg8: memref<8x128xf32, #tpu.memory_space<vmem>>) attributes {dimension_semantics = [#tpu.dimension_semantics<parallel>], iteration_bounds = array<i64: 2>, scalar_prefetch = 0 : i64, scratch_operands = 0 : i64, tpu.core_type = #tpu.core_type<tc>, window_params = [{transform_indices = @transform_0, window_bounds = array<i64: 2>}, {transform_indices = @transform_1, window_bounds = array<i64: 8, 128>}, {transform_indices = @transform_2, window_bounds = array<i64: 8, 128>}, {pipeline_mode = #tpu.pipeline_mode<synchronous>, transform_indices = @transform_3, window_bounds = array<i64: 128, 128>}, {pipeline_mode = #tpu.pipeline_mode<synchronous>, transform_indices = @transform_4, window_bounds = array<i64: 1, 128>}, {transform_indices = @transform_5, window_bounds = array<i64: 8, 128>}, {transform_indices = @transform_6, window_bounds = array<i64: 8, 128>}, {transform_indices = @transform_7, window_bounds = array<i64: 8, 128>}]} {
    %c0 = arith.constant 0 : index
    %0 = memref.load %arg1[%c0] : memref<2xf32, #tpu.memory_space<smem>>
    %c1 = arith.constant 1 : index
    %1 = memref.load %arg1[%c1] : memref<2xf32, #tpu.memory_space<smem>>
    %c0_0 = arith.constant 0 : index
    %c0_1 = arith.constant 0 : index
    %2 = vector.load %arg2[%c0_0, %c0_1] : memref<8x128xf32, #tpu.memory_space<vmem>>, vector<8x128xf32>
    %c0_2 = arith.constant 0 : index
    %c0_3 = arith.constant 0 : index
    %3 = vector.load %arg4[%c0_2, %c0_3] : memref<128x128xf32, #tpu.memory_space<vmem>>, vector<128x128xf32>
    %cst = arith.constant dense<0.000000e+00> : vector<8x128xf32>
    %4 = tpu.matmul %2, %3, %cst {dimension_numbers = #tpu.dot_dimension_numbers<[1], [0], [0], [1], [0, 0, 1, 1], [], []>} : vector<8x128xf32>, vector<128x128xf32>, vector<8x128xf32> -> vector<8x128xf32>
    %c0_4 = arith.constant 0 : index
    %c0_5 = arith.constant 0 : index
    %5 = vector.load %arg5[%c0_4, %c0_5] : memref<1x128xf32, #tpu.memory_space<vmem>>, vector<1x128xf32>
    %6 = vector.broadcast %5 : vector<1x128xf32> to vector<8x128xf32>
    %7 = arith.addf %4, %6 : vector<8x128xf32>
    %8 = math.tanh %7 : vector<8x128xf32>
    %c0_6 = arith.constant 0 : index
    %c0_7 = arith.constant 0 : index
    %9 = vector.load %arg3[%c0_6, %c0_7] : memref<8x128xf32, #tpu.memory_space<vmem>>, vector<8x128xf32>
    %10 = vector.broadcast %1 : f32 to vector<8x128xf32>
    %11 = arith.mulf %9, %10 : vector<8x128xf32>
    %12 = arith.addf %2, %11 : vector<8x128xf32>
    %13 = vector.broadcast %0 : f32 to vector<8x128xf32>
    %14 = arith.mulf %8, %13 : vector<8x128xf32>
    %15 = arith.addf %12, %14 : vector<8x128xf32>
    %c0_8 = arith.constant 0 : index
    %c0_9 = arith.constant 0 : index
    %16 = vector.load %arg6[%c0_8, %c0_9] : memref<8x128xf32, #tpu.memory_space<vmem>>, vector<8x128xf32>
    tpu.vector_store %arg6[%c0_8, %c0_9], %15 {strides = array<i32>} : memref<8x128xf32, #tpu.memory_space<vmem>>, vector<8x128xf32>,
    %c0_10 = arith.constant 0 : index
    %c0_11 = arith.constant 0 : index
    %17 = vector.load %arg7[%c0_10, %c0_11] : memref<8x128xf32, #tpu.memory_space<vmem>>, vector<8x128xf32>
    tpu.vector_store %arg7[%c0_10, %c0_11], %8 {strides = array<i32>} : memref<8x128xf32, #tpu.memory_space<vmem>>, vector<8x128xf32>,
    %c0_12 = arith.constant 0 : index
    %c0_13 = arith.constant 0 : index
    %18 = vector.load %arg8[%c0_12, %c0_13] : memref<8x128xf32, #tpu.memory_space<vmem>>, vector<8x128xf32>
    tpu.vector_store %arg8[%c0_12, %c0_13], %11 {strides = array<i32>} : memref<8x128xf32, #tpu.memory_space<vmem>>, vector<8x128xf32>,
    return
  }
  func.func @transform_0(%arg0: i32) -> i32 {
    %c0_i32 = arith.constant 0 : i32
    %c0_i32_0 = arith.constant 0 : i32
    return %c0_i32 : i32
  }
  func.func @transform_1(%arg0: i32) -> (i32, i32) {
    %c0_i32 = arith.constant 0 : i32
    %c0_i32_0 = arith.constant 0 : i32
    return %arg0, %c0_i32 : i32, i32
  }
  func.func @transform_2(%arg0: i32) -> (i32, i32) {
    %c0_i32 = arith.constant 0 : i32
    %c0_i32_0 = arith.constant 0 : i32
    return %arg0, %c0_i32 : i32, i32
  }
  func.func @transform_3(%arg0: i32) -> (i32, i32) {
    %c0_i32 = arith.constant 0 : i32
    %c0_i32_0 = arith.constant 0 : i32
    %c0_i32_1 = arith.constant 0 : i32
    return %c0_i32, %c0_i32_0 : i32, i32
  }
  func.func @transform_4(%arg0: i32) -> (i32, i32) {
    %c0_i32 = arith.constant 0 : i32
    %c0_i32_0 = arith.constant 0 : i32
    %c0_i32_1 = arith.constant 0 : i32
    return %c0_i32, %c0_i32_0 : i32, i32
  }
  func.func @transform_5(%arg0: i32) -> (i32, i32) {
    %c0_i32 = arith.constant 0 : i32
    %c0_i32_0 = arith.constant 0 : i32
    return %arg0, %c0_i32 : i32, i32
  }
  func.func @transform_6(%arg0: i32) -> (i32, i32) {
    %c0_i32 = arith.constant 0 : i32
    %c0_i32_0 = arith.constant 0 : i32
    return %arg0, %c0_i32 : i32, i32
  }
  func.func @transform_7(%arg0: i32) -> (i32, i32) {
    %c0_i32 = arith.constant 0 : i32
    %c0_i32_0 = arith.constant 0 : i32
    return %arg0, %c0_i32 : i32, i32
  }
}

</mosaic_0001>

<llo_original>
// kernel: tpu_custom_call.1
$region0: #{tpu_custom_call.1}
  #allocation0 [shape = 'u32[]', space=smem, size = 0x4, offset = 0x4, fixed_abs, tag = 'smem constant byte address 0x4 - core index']
  #allocation1 [shape = 'u32[144,128]{1,0:T(1,128)}', space=vmem, size = 0x12000, scoped, tag = 'internal scratch']
  %s0 = inlined_call_operand.hbm [shape: f32[2], index: 0, kind: input, shape index: {}]
  %s1 = inlined_call_operand.hbm [shape: f32[16,128], index: 1, kind: input, shape index: {}]
  %s2 = inlined_call_operand.hbm [shape: f32[16,128], index: 2, kind: input, shape index: {}]
  %s3 = inlined_call_operand.hbm [shape: f32[128,128], index: 3, kind: input, shape index: {}]
  %s4 = inlined_call_operand.vmem [shape: f32[1,128], index: 4, kind: input, shape index: {}]
  %s5 = inlined_call_operand.hbm [shape: f32[16,128], index: 5, kind: output, shape index: {0}]
  %s6 = inlined_call_operand.hbm [shape: f32[16,128], index: 6, kind: output, shape index: {1}]
  %s7 = inlined_call_operand.hbm [shape: f32[16,128], index: 7, kind: output, shape index: {2}]
  %8 = xla_tuple %s5, %s6, %s7
  %s9 = sld [smem:[#allocation0]]
  $region85: #{tpu_custom_call.1} parent=0
    _
  %s11 = ssub.s32 1, %s9
  %s12 = scalar_select 0, %s11, %s9
  $region1: #{tpu_custom_call.1} parent=0
    #allocation2 [shape = 'u8[512]{0}', space=smem, size = 0x200, scoped, tag = 'input window, operand 0, single buffered']
    #allocation3 [shape = 's32[2]{0}', space=sflag, size = 0x8, scoped, tag = 'scoped memory for tpu_custom_call.1']
    #allocation4 [shape = 's32[2]{0}', space=sflag, size = 0x8, scoped, tag = 'scoped memory for tpu_custom_call.1']
    #allocation5 [shape = 's32[2]{0}', space=sflag, size = 0x8, scoped, tag = 'scoped memory for tpu_custom_call.1']
    #allocation6 [shape = 'u8[8192]{0}', space=vmem, size = 0x2000, scoped, tag = 'input window, operand 1']
    #allocation7 [shape = 'u8[8192]{0}', space=vmem, size = 0x2000, scoped, tag = 'input window, operand 2']
    #allocation8 [shape = 's32[2]{0}', space=sflag, size = 0x8, scoped, tag = 'scoped memory for tpu_custom_call.1']
    #allocation9 [shape = 'u8[65536]{0}', space=vmem, size = 0x10000, scoped, tag = 'input window, operand 3, single buffered']
    #allocation10 [shape = 'u8[8192]{0}', space=vmem, size = 0x2000, scoped, tag = 'output window, operand 0']
    #allocation11 [shape = 'u8[8192]{0}', space=vmem, size = 0x2000, scoped, tag = 'output window, operand 1']
    #allocation12 [shape = 's32[2]{0}', space=sflag, size = 0x8, scoped, tag = 'scoped memory for tpu_custom_call.1']
    #allocation13 [shape = 'u8[8192]{0}', space=vmem, size = 0x2000, scoped, tag = 'output window, operand 2']
    %13 = vsyncpa [#allocation5], 0
    %14 = vsyncpa [#allocation3], 0
    %s15 = scalar_lea.sflag [#allocation3], 1
    %16 = vsyncpa %s15, 0
    %17 = vsyncpa [#allocation8], 0
    %s18 = scalar_lea.sflag [#allocation8], 1
    %19 = vsyncpa %s18, 0
    %20 = vsyncpa [#allocation4], 0
    %s21 = scalar_lea.sflag [#allocation4], 1
    %22 = vsyncpa %s21, 0
    %23 = vsyncpa [#allocation12], 0
    %s24 = scalar_lea.sflag [#allocation12], 1
    %25 = vsyncpa %s24, 0
    loop: start=0, step=1, limit=4
    $region2: #{tpu_custom_call.1} parent=1 // loop_pre_header
      _
    $region3: #{tpu_custom_call.1} parent=1 // loop_header
      %s27 = sphi 0, %s31
      %p28 = scmp.ge.s32.totalorder %s27, 4
      %s35 = sphi 0, %s35
      %s37 = sphi 0, %s35
      %s38 = sphi 0, %s37
      %s52 = sphi 0, %s38
      %s58 = sphi 0, %s60
      %s61 = sphi 0, %s58
      %s62 = sphi 0, %s61
      %s78 = sphi 0, %s62
      %s84 = sphi 0, %s86
      %s87 = sphi 0, %s84
      %s88 = sphi 0, %s87
      %s104 = sphi 0, %s88
      %s108 = sphi 0, %s108
      %s110 = sphi 0, %s108
      %s111 = sphi 0, %s110
      %s125 = sphi 0, %s111
      %s129 = sphi 0, %s129
      %s131 = sphi 0, %s129
      %s132 = sphi 0, %s131
      %s146 = sphi 0, %s132
      %s152 = sphi 0, %s154
      %s155 = sphi 0, %s152
      %s156 = sphi 0, %s155
      %s172 = sphi 0, %s156
      %s178 = sphi 0, %s180
      %s181 = sphi 0, %s178
      %s182 = sphi 0, %s181
      %s198 = sphi 0, %s182
      %s204 = sphi 0, %s206
      %s207 = sphi 0, %s204
      %s208 = sphi 0, %s207
      %s224 = sphi 0, %s208
    $region4: #{tpu_custom_call.1} parent=1 // loop_header_branch
      %30 = sbr.rel (%p28) target = $region8
    $region5: #{tpu_custom_call.1} parent=1 // loop_body
      %s32 = ssub.s32 %s27, 1
      %s33 = ssub.s32 %s27, 2
      %s34 = sadd.s32 %s27, 1
      %s36 = sadd.s32 %s35, 1
      %p39 = scmp.eq.s32.totalorder %s27, 1
      %p40 = scmp.ne.s32.totalorder %s35, %s37
      %p41 = scmp.eq.s32.totalorder %s27, 0
      %p42 = por %p40, %p41
      %p43 = scmp.ne.s32.totalorder %s35, %s37
      %p44 = scmp.eq.s32.totalorder %s32, 1
      %p45 = por %p43, %p44
      %p46 = scmp.ne.s32.totalorder %s37, %s38
      %p47 = scmp.eq.s32.totalorder %s32, 0
      %p48 = por %p46, %p47
      %p49 = scmp.ne.s32.totalorder %s37, %s38
      %p50 = scmp.eq.s32.totalorder %s33, 1
      %p51 = por %p49, %p50
      %p53 = scmp.ne.s32.totalorder %s38, %s52
      %p54 = scmp.eq.s32.totalorder %s33, 0
      %p55 = por %p53, %p54
      %s56 = ssub.s32 %s27, %s34
      %p57 = scmp.eq.s32.totalorder %s56, 0
      %s59 = sadd.s32 %s58, 1
      %s60 = scalar_select %p57, %s58, %s59
      %p63 = pneg %p57
      %p64 = scmp.eq.s32.totalorder %s27, 1
      %p65 = por %p63, %p64
      %p66 = scmp.ne.s32.totalorder %s58, %s61
      %p67 = scmp.eq.s32.totalorder %s27, 0
      %p68 = por %p66, %p67
      %p69 = scmp.ne.s32.totalorder %s58, %s61
      %p70 = scmp.eq.s32.totalorder %s32, 1
      %p71 = por %p69, %p70
      %p72 = scmp.ne.s32.totalorder %s61, %s62
      %p73 = scmp.eq.s32.totalorder %s32, 0
      %p74 = por %p72, %p73
      %p75 = scmp.ne.s32.totalorder %s61, %s62
      %p76 = scmp.eq.s32.totalorder %s33, 1
      %p77 = por %p75, %p76
      %p79 = scmp.ne.s32.totalorder %s62, %s78
      %p80 = scmp.eq.s32.totalorder %s33, 0
      %p81 = por %p79, %p80
      %s82 = ssub.s32 %s27, %s34
      %p83 = scmp.eq.s32.totalorder %s82, 0
      %s85 = sadd.s32 %s84, 1
      %s86 = scalar_select %p83, %s84, %s85
      %p89 = pneg %p83
      %p90 = scmp.eq.s32.totalorder %s27, 1
      %p91 = por %p89, %p90
      %p92 = scmp.ne.s32.totalorder %s84, %s87
      %p93 = scmp.eq.s32.totalorder %s27, 0
      %p94 = por %p92, %p93
      %p95 = scmp.ne.s32.totalorder %s84, %s87
      %p96 = scmp.eq.s32.totalorder %s32, 1
      %p97 = por %p95, %p96
      %p98 = scmp.ne.s32.totalorder %s87, %s88
      %p99 = scmp.eq.s32.totalorder %s32, 0
      %p100 = por %p98, %p99
      %p101 = scmp.ne.s32.totalorder %s87, %s88
      %p102 = scmp.eq.s32.totalorder %s33, 1
      %p103 = por %p101, %p102
      %p105 = scmp.ne.s32.totalorder %s88, %s104
      %p106 = scmp.eq.s32.totalorder %s33, 0
      %p107 = por %p105, %p106
      %s109 = sadd.s32 %s108, 1
      %p112 = scmp.eq.s32.totalorder %s27, 1
      %p113 = scmp.ne.s32.totalorder %s108, %s110
      %p114 = scmp.eq.s32.totalorder %s27, 0
      %p115 = por %p113, %p114
      %p116 = scmp.ne.s32.totalorder %s108, %s110
      %p117 = scmp.eq.s32.totalorder %s32, 1
      %p118 = por %p116, %p117
      %p119 = scmp.ne.s32.totalorder %s110, %s111
      %p120 = scmp.eq.s32.totalorder %s32, 0
      %p121 = por %p119, %p120
      %p122 = scmp.ne.s32.totalorder %s110, %s111
      %p123 = scmp.eq.s32.totalorder %s33, 1
      %p124 = por %p122, %p123
      %p126 = scmp.ne.s32.totalorder %s111, %s125
      %p127 = scmp.eq.s32.totalorder %s33, 0
      %p128 = por %p126, %p127
      %s130 = sadd.s32 %s129, 1
      %p133 = scmp.eq.s32.totalorder %s27, 1
      %p134 = scmp.ne.s32.totalorder %s129, %s131
      %p135 = scmp.eq.s32.totalorder %s27, 0
      %p136 = por %p134, %p135
      %p137 = scmp.ne.s32.totalorder %s129, %s131
      %p138 = scmp.eq.s32.totalorder %s32, 1
      %p139 = por %p137, %p138
      %p140 = scmp.ne.s32.totalorder %s131, %s132
      %p141 = scmp.eq.s32.totalorder %s32, 0
      %p142 = por %p140, %p141
      %p143 = scmp.ne.s32.totalorder %s131, %s132
      %p144 = scmp.eq.s32.totalorder %s33, 1
      %p145 = por %p143, %p144
      %p147 = scmp.ne.s32.totalorder %s132, %s146
      %p148 = scmp.eq.s32.totalorder %s33, 0
      %p149 = por %p147, %p148
      %s150 = ssub.s32 %s27, %s34
      %p151 = scmp.eq.s32.totalorder %s150, 0
      %s153 = sadd.s32 %s152, 1
      %s154 = scalar_select %p151, %s152, %s153
      %p157 = pneg %p151
      %p158 = scmp.eq.s32.totalorder %s27, 1
      %p159 = por %p157, %p158
      %p160 = scmp.ne.s32.totalorder %s152, %s155
      %p161 = scmp.eq.s32.totalorder %s27, 0
      %p162 = por %p160, %p161
      %p163 = scmp.ne.s32.totalorder %s152, %s155
      %p164 = scmp.eq.s32.totalorder %s32, 1
      %p165 = por %p163, %p164
      %p166 = scmp.ne.s32.totalorder %s155, %s156
      %p167 = scmp.eq.s32.totalorder %s32, 0
      %p168 = por %p166, %p167
      %p169 = scmp.ne.s32.totalorder %s155, %s156
      %p170 = scmp.eq.s32.totalorder %s33, 1
      %p171 = por %p169, %p170
      %p173 = scmp.ne.s32.totalorder %s156, %s172
      %p174 = scmp.eq.s32.totalorder %s33, 0
      %p175 = por %p173, %p174
      %s176 = ssub.s32 %s27, %s34
      %p177 = scmp.eq.s32.totalorder %s176, 0
      %s179 = sadd.s32 %s178, 1
      %s180 = scalar_select %p177, %s178, %s179
      %p183 = pneg %p177
      %p184 = scmp.eq.s32.totalorder %s27, 1
      %p185 = por %p183, %p184
      %p186 = scmp.ne.s32.totalorder %s178, %s181
      %p187 = scmp.eq.s32.totalorder %s27, 0
      %p188 = por %p186, %p187
      %p189 = scmp.ne.s32.totalorder %s178, %s181
      %p190 = scmp.eq.s32.totalorder %s32, 1
      %p191 = por %p189, %p190
      %p192 = scmp.ne.s32.totalorder %s181, %s182
      %p193 = scmp.eq.s32.totalorder %s32, 0
      %p194 = por %p192, %p193
      %p195 = scmp.ne.s32.totalorder %s181, %s182
      %p196 = scmp.eq.s32.totalorder %s33, 1
      %p197 = por %p195, %p196
      %p199 = scmp.ne.s32.totalorder %s182, %s198
      %p200 = scmp.eq.s32.totalorder %s33, 0
      %p201 = por %p199, %p200
      %s202 = ssub.s32 %s27, %s34
      %p203 = scmp.eq.s32.totalorder %s202, 0
      %s205 = sadd.s32 %s204, 1
      %s206 = scalar_select %p203, %s204, %s205
      %p209 = pneg %p203
      %p210 = scmp.eq.s32.totalorder %s27, 1
      %p211 = por %p209, %p210
      %p212 = scmp.ne.s32.totalorder %s204, %s207
      %p213 = scmp.eq.s32.totalorder %s27, 0
      %p214 = por %p212, %p213
      %p215 = scmp.ne.s32.totalorder %s204, %s207
      %p216 = scmp.eq.s32.totalorder %s32, 1
      %p217 = por %p215, %p216
      %p218 = scmp.ne.s32.totalorder %s207, %s208
      %p219 = scmp.eq.s32.totalorder %s32, 0
      %p220 = por %p218, %p219
      %p221 = scmp.ne.s32.totalorder %s207, %s208
      %p222 = scmp.eq.s32.totalorder %s33, 1
      %p223 = por %p221, %p222
      %p225 = scmp.ne.s32.totalorder %s208, %s224
      %p226 = scmp.eq.s32.totalorder %s33, 0
      %p227 = por %p225, %p226
      %p228 = scmp.le.s32.totalorder 1, %s27
      %p229 = scmp.lt.s32.totalorder %s27, 3
      %p230 = pnand %p228, %p229
      %p231 = pneg %p230
      // Predicated region
      $region9: #{tpu_custom_call.1} parent=5 // pred_check
        _
      $region10: #{tpu_custom_call.1} parent=5 // pred_check_branch
        %233 = sbr.rel (%p230) target = $region12
      $region11: #{tpu_custom_call.1} parent=5 // pred_region
        %s234 = ssub.s32 %s27, 1
        // Predicated region
        $region13: #{tpu_custom_call.1} parent=11 // pred_check
          %p235 = pneg %p48
        $region14: #{tpu_custom_call.1} parent=11 // pred_check_branch
          %237 = sbr.rel (%p235) target = $region16
        $region15: #{tpu_custom_call.1} parent=11 // pred_region
          %s239 = ssub.s32 16, 16
          %240 = vsyncadd [#allocation5], %s239
          %243 = dma.hbm_to_smem %s0, 16, [#allocation2], [#allocation5]
        $region16: #{tpu_custom_call.1} parent=11 // pred_fallthru
          _
        // Predicated region
        $region17: #{tpu_custom_call.1} parent=11 // pred_check
          %p244 = pneg %p121
        $region18: #{tpu_custom_call.1} parent=11 // pred_check_branch
          %246 = sbr.rel (%p244) target = $region20
        $region19: #{tpu_custom_call.1} parent=11 // pred_region
          %s248 = ssub.s32 2048, 2048
          %249 = vsyncadd [#allocation8], %s248
          %s250 = sshll.u32 [#allocation9], 4
          %s251 = int_to_ptr.vmem [resolvable:$true] %s250
          %256 = dma.hbm_to_vmem [thread:$0]  %s3, 2048, %s251, [#allocation8], 128, 128, 8
        $region20: #{tpu_custom_call.1} parent=11 // pred_fallthru
          _
        // Predicated region
        $region21: #{tpu_custom_call.1} parent=11 // pred_check
          %p257 = pneg %p142
        $region22: #{tpu_custom_call.1} parent=11 // pred_check_branch
          %259 = sbr.rel (%p257) target = $region24
        $region23: #{tpu_custom_call.1} parent=11 // pred_region
          _
        $region24: #{tpu_custom_call.1} parent=11 // pred_fallthru
          _
      $region12: #{tpu_custom_call.1} parent=5 // pred_fallthru
        _
      %p260 = scmp.lt.s32.totalorder %s27, 2
      // Predicated region
      $region25: #{tpu_custom_call.1} parent=5 // pred_check
        %p261 = pneg %p260
      $region26: #{tpu_custom_call.1} parent=5 // pred_check_branch
        %263 = sbr.rel (%p261) target = $region28
      $region27: #{tpu_custom_call.1} parent=5 // pred_region
        // Predicated region
        $region29: #{tpu_custom_call.1} parent=27 // pred_check
          %p264 = pneg %p68
        $region30: #{tpu_custom_call.1} parent=27 // pred_check_branch
          %266 = sbr.rel (%p264) target = $region32
        $region31: #{tpu_custom_call.1} parent=27 // pred_region
          %s267 = sand.u32 %s58, 1
          %s268 = scalar_lea.sflag [#allocation3], %s267
          %s269 = sand.u32 %s58, 1
          %s270 = smul.addr %s269, 8
          %s271 = scalar_lea.vmem [#allocation6], %s270
          %s273 = ssub.s32 128, 128
          %274 = vsyncadd %s268, %s273
          %s275 = smul.addr %s27, 128
          %s276 = scalar_lea.hbm %s1, %s275
          %s278 = sshll.u32 %s271, 4
          %s279 = int_to_ptr.vmem [resolvable:$true] %s278
          %281 = dma.hbm_to_vmem [thread:$0]  %s276, 128, %s279, %s268
        $region32: #{tpu_custom_call.1} parent=27 // pred_fallthru
          _
        // Predicated region
        $region33: #{tpu_custom_call.1} parent=27 // pred_check
          %p282 = pneg %p94
        $region34: #{tpu_custom_call.1} parent=27 // pred_check_branch
          %284 = sbr.rel (%p282) target = $region36
        $region35: #{tpu_custom_call.1} parent=27 // pred_region
          %s285 = sand.u32 %s27, 1
          %s286 = scalar_lea.sflag [#allocation8], %s285
          %s287 = sand.u32 %s84, 1
          %s288 = smul.addr %s287, 8
          %s289 = scalar_lea.vmem [#allocation7], %s288
          %s291 = ssub.s32 128, 128
          %292 = vsyncadd %s286, %s291
          %s293 = smul.addr %s27, 128
          %s294 = scalar_lea.hbm %s2, %s293
          %s296 = sshll.u32 %s289, 4
          %s297 = int_to_ptr.vmem [resolvable:$true] %s296
          %299 = dma.hbm_to_vmem [thread:$0]  %s294, 128, %s297, %s286
        $region36: #{tpu_custom_call.1} parent=27 // pred_fallthru
          _
      $region28: #{tpu_custom_call.1} parent=5 // pred_fallthru
        _
      %p300 = scmp.le.s32.totalorder 1, %s27
      %p301 = scmp.lt.s32.totalorder %s27, 3
      %p302 = pnand %p300, %p301
      %p303 = pneg %p302
      // Predicated region
      $region37: #{tpu_custom_call.1} parent=5 // pred_check
        _
      $region38: #{tpu_custom_call.1} parent=5 // pred_check_branch
        %305 = sbr.rel (%p302) target = $region40
      $region39: #{tpu_custom_call.1} parent=5 // pred_region
        %s306 = ssub.s32 %s27, 1
        // Predicated region
        $region41: #{tpu_custom_call.1} parent=39 // pred_check
          %p307 = pneg %p48
        $region42: #{tpu_custom_call.1} parent=39 // pred_check_branch
          %309 = sbr.rel (%p307) target = $region44
        $region43: #{tpu_custom_call.1} parent=39 // pred_region
          %310 = dma.done [#allocation5], 16
        $region44: #{tpu_custom_call.1} parent=39 // pred_fallthru
          _
        %s311 = sand.u32 %s61, 1
        %s312 = scalar_lea.sflag [#allocation3], %s311
        %s313 = sand.u32 %s61, 1
        %s314 = smul.addr %s313, 8
        %s315 = scalar_lea.vmem [#allocation6], %s314
        // Predicated region
        $region45: #{tpu_custom_call.1} parent=39 // pred_check
          %p316 = pneg %p74
        $region46: #{tpu_custom_call.1} parent=39 // pred_check_branch
          %318 = sbr.rel (%p316) target = $region48
        $region47: #{tpu_custom_call.1} parent=39 // pred_region
          %319 = dma.done %s312, 128
        $region48: #{tpu_custom_call.1} parent=39 // pred_fallthru
          _
        %s320 = sand.u32 %s32, 1
        %s321 = scalar_lea.sflag [#allocation8], %s320
        %s322 = sand.u32 %s87, 1
        %s323 = smul.addr %s322, 8
        %s324 = scalar_lea.vmem [#allocation7], %s323
        // Predicated region
        $region49: #{tpu_custom_call.1} parent=39 // pred_check
          %p325 = pneg %p100
        $region50: #{tpu_custom_call.1} parent=39 // pred_check_branch
          %327 = sbr.rel (%p325) target = $region52
        $region51: #{tpu_custom_call.1} parent=39 // pred_region
          %328 = dma.done %s321, 128
        $region52: #{tpu_custom_call.1} parent=39 // pred_fallthru
          _
        // Predicated region
        $region53: #{tpu_custom_call.1} parent=39 // pred_check
          %p329 = pneg %p121
        $region54: #{tpu_custom_call.1} parent=39 // pred_check_branch
          %331 = sbr.rel (%p329) target = $region56
        $region55: #{tpu_custom_call.1} parent=39 // pred_region
          %332 = dma.done [#allocation8], 2048
        $region56: #{tpu_custom_call.1} parent=39 // pred_fallthru
          _
        %333 = sfence
        %p334 = pneg %p48
        %p335 = pneg %p45
        %s336 = sand.u32 %s61, 1
        %s337 = scalar_lea.sflag [#allocation3], %s336
        %s338 = sand.u32 %s61, 1
        %s339 = smul.addr %s338, 8
        %s340 = scalar_lea.vmem [#allocation6], %s339
        %p341 = pneg %p74
        %p342 = pneg %p71
        %s343 = sand.u32 %s32, 1
        %s344 = scalar_lea.sflag [#allocation8], %s343
        %s345 = sand.u32 %s87, 1
        %s346 = smul.addr %s345, 8
        %s347 = scalar_lea.vmem [#allocation7], %s346
        %p348 = pneg %p100
        %p349 = pneg %p97
        %p350 = pneg %p121
        %p351 = pneg %p118
        %p352 = pneg %p142
        %p353 = pneg %p139
        %p354 = pneg %p168
        %p355 = pneg %p165
        %s356 = sand.u32 %s155, 1
        %s357 = scalar_lea.sflag [#allocation4], %s356
        %s358 = sand.u32 %s155, 1
        %s359 = smul.addr %s358, 8
        %s360 = scalar_lea.vmem [#allocation10], %s359
        %p361 = pneg %p194
        %p362 = pneg %p191
        %s363 = sand.u32 %s32, 1
        %s364 = scalar_lea.sflag [#allocation12], %s363
        %s365 = sand.u32 %s181, 1
        %s366 = smul.addr %s365, 8
        %s367 = scalar_lea.vmem [#allocation11], %s366
        %p368 = pneg %p220
        %p369 = pneg %p217
        %s370 = sand.u32 %s32, 1
        %s371 = scalar_lea.sflag [#allocation12], %s370
        %s372 = sand.u32 %s207, 1
        %s373 = smul.addr %s372, 8
        %s374 = scalar_lea.vmem [#allocation13], %s373
        %s375 = sld [smem:[#allocation2]]
        %s376 = sld [smem:[#allocation2 + $0x1]]
        %v377 = vld [vmem:[%s315] sm:$0xff]
        %v378 = vld [vmem:[#allocation9] sm:$0xff]
        %v379 = vld [vmem:[#allocation9 + $0x8] sm:$0xff]
        %v380 = vld [vmem:[#allocation9 + $0x10] sm:$0xff]
        %v381 = vld [vmem:[#allocation9 + $0x18] sm:$0xff]
        %v382 = vld [vmem:[#allocation9 + $0x20] sm:$0xff]
        %v383 = vld [vmem:[#allocation9 + $0x28] sm:$0xff]
        %v384 = vld [vmem:[#allocation9 + $0x30] sm:$0xff]
        %v385 = vld [vmem:[#allocation9 + $0x38] sm:$0xff]
        %v386 = vld [vmem:[#allocation9 + $0x40] sm:$0xff]
        %v387 = vld [vmem:[#allocation9 + $0x48] sm:$0xff]
        %v388 = vld [vmem:[#allocation9 + $0x50] sm:$0xff]
        %v389 = vld [vmem:[#allocation9 + $0x58] sm:$0xff]
        %v390 = vld [vmem:[#allocation9 + $0x60] sm:$0xff]
        %v391 = vld [vmem:[#allocation9 + $0x68] sm:$0xff]
        %v392 = vld [vmem:[#allocation9 + $0x70] sm:$0xff]
        %v393 = vld [vmem:[#allocation9 + $0x78] sm:$0xff]
        %v394 = vld [vmem:[%s4] sm:$0x1]
        %v396 = vlaneseq
        %v397 = vshrl.u32 %v396, 7
        %v398 = vsub.s32 0, %v397
        %v399 = vrot.slane %v394, %v398
        %401 = vmatprep.subr.mxu0 0.0
        %402 = vmatpush1.msra.mxu0 %v378
        %403 = vmatprep.subr.mxu0 0.0
        %404 = vmatpush1.msra.mxu0 %v379
        %405 = vmatprep.subr.mxu0 0.0
        %406 = vmatpush1.msra.mxu0 %v380
        %407 = vmatprep.subr.mxu0 0.0
        %408 = vmatpush1.msra.mxu0 %v381
        %409 = vmatprep.subr.mxu0 0.0
        %410 = vmatpush1.msra.mxu0 %v382
        %411 = vmatprep.subr.mxu0 0.0
        %412 = vmatpush1.msra.mxu0 %v383
        %413 = vmatprep.subr.mxu0 0.0
        %414 = vmatpush1.msra.mxu0 %v384
        %415 = vmatprep.subr.mxu0 0.0
        %416 = vmatpush1.msra.mxu0 %v385
        %417 = vmatprep.subr.mxu0 0.0
        %418 = vmatpush1.msra.mxu0 %v386
        %419 = vmatprep.subr.mxu0 0.0
        %420 = vmatpush1.msra.mxu0 %v387
        %421 = vmatprep.subr.mxu0 0.0
        %422 = vmatpush1.msra.mxu0 %v388
        %423 = vmatprep.subr.mxu0 0.0
        %424 = vmatpush1.msra.mxu0 %v389
        %425 = vmatprep.subr.mxu0 0.0
        %426 = vmatpush1.msra.mxu0 %v390
        %427 = vmatprep.subr.mxu0 0.0
        %428 = vmatpush1.msra.mxu0 %v391
        %429 = vmatprep.subr.mxu0 0.0
        %430 = vmatpush1.msra.mxu0 %v392
        %431 = vmatprep.subr.mxu0 0.0
        %432 = vmatpush1.msra.mxu0 %v393
        %433 = vmatprep.subr.mxu0 0.0
        %434 = vmatpush1.msra.mxu0 0.0
        %435 = vmatprep.subr.mxu0 0.0
        %436 = vmatpush1.msra.mxu0 0.0
        %437 = vmatprep.subr.mxu0 0.0
        %438 = vmatpush1.msra.mxu0 0.0
        %439 = vmatprep.subr.mxu0 0.0
        %440 = vmatpush1.msra.mxu0 0.0
        %441 = vmatprep.subr.mxu0 0.0
        %442 = vmatpush1.msra.mxu0 0.0
        %443 = vmatprep.subr.mxu0 0.0
        %444 = vmatpush1.msra.mxu0 0.0
        %445 = vmatprep.subr.mxu0 0.0
        %446 = vmatpush1.msra.mxu0 0.0
        %447 = vmatprep.subr.mxu0 0.0
        %448 = vmatpush1.msra.mxu0 0.0
        %449 = vmatprep.subr.mxu0 0.0
        %450 = vmatpush1.msra.mxu0 0.0
        %451 = vmatprep.subr.mxu0 0.0
        %452 = vmatpush1.msra.mxu0 0.0
        %453 = vmatprep.subr.mxu0 0.0
        %454 = vmatpush1.msra.mxu0 0.0
        %455 = vmatprep.subr.mxu0 0.0
        %456 = vmatpush1.msra.mxu0 0.0
        %457 = vmatprep.subr.mxu0 0.0
        %458 = vmatpush1.msra.mxu0 0.0
        %459 = vmatprep.subr.mxu0 0.0
        %460 = vmatpush1.msra.mxu0 0.0
        %461 = vmatprep.subr.mxu0 0.0
        %462 = vmatpush1.msra.mxu0 0.0
        %463 = vmatprep.subr.mxu0 0.0
        %464 = vmatpush1.msra.mxu0 0.0
        %465 = vmatprep.mubr.f32.mxu0 0.0
        %466 = vmatmul.mubr.f32.gmra.mrb[0].mxu0 %v377
        %v467 = vpop.f32.mrb[0].mxu0
        %v468 = vadd.f32 %v399, %v467
        %v469 = vpop.f32.mrb[0].mxu0
        %470 = vdwg.mxu0
        %v471 = vtanh.pop %v468
        %v472 = vld [vmem:[%s324] sm:$0xff]
        %v473 = vstv %s376
        %v474 = vmul.f32 %v472, %v473
        %v475 = vadd.f32 %v377, %v474
        %v476 = vstv %s375
        %v477 = vmul.f32 %v471, %v476
        %v478 = vadd.f32 %v475, %v477
        %479 = vst [vmem:[%s360] sm:$0xff] %v478
        %480 = vst [vmem:[%s367] sm:$0xff] %v471
        %481 = vst [vmem:[%s374] sm:$0xff] %v474
        %s482 = sand.u32 %s155, 1
        %s483 = scalar_lea.sflag [#allocation4], %s482
        %s484 = sand.u32 %s155, 1
        %s485 = smul.addr %s484, 8
        %s486 = scalar_lea.vmem [#allocation10], %s485
        %s487 = sand.u32 %s32, 1
        %s488 = scalar_lea.sflag [#allocation12], %s487
        %s489 = sand.u32 %s181, 1
        %s490 = smul.addr %s489, 8
        %s491 = scalar_lea.vmem [#allocation11], %s490
        %s492 = sand.u32 %s32, 1
        %s493 = scalar_lea.sflag [#allocation12], %s492
        %s494 = sand.u32 %s207, 1
        %s495 = smul.addr %s494, 8
        %s496 = scalar_lea.vmem [#allocation13], %s495
        // Predicated region
        $region57: #{tpu_custom_call.1} parent=39 // pred_check
          %p497 = pneg %p165
        $region58: #{tpu_custom_call.1} parent=39 // pred_check_branch
          %499 = sbr.rel (%p497) target = $region60
        $region59: #{tpu_custom_call.1} parent=39 // pred_region
          %s501 = ssub.s32 128, 128
          %502 = vsyncadd %s483, %s501
          %s503 = smul.addr %s32, 128
          %s504 = scalar_lea.hbm %s5, %s503
          %s506 = sshll.u32 %s486, 4
          %s507 = int_to_ptr.vmem [resolvable:$true] %s506
          %509 = dma.vmem_to_hbm [thread:$0]  %s507, 128, %s504, %s483
        $region60: #{tpu_custom_call.1} parent=39 // pred_fallthru
          _
        // Predicated region
        $region61: #{tpu_custom_call.1} parent=39 // pred_check
          %p510 = pneg %p191
        $region62: #{tpu_custom_call.1} parent=39 // pred_check_branch
          %512 = sbr.rel (%p510) target = $region64
        $region63: #{tpu_custom_call.1} parent=39 // pred_region
          %s514 = ssub.s32 128, 128
          %515 = vsyncadd %s488, %s514
          %s516 = smul.addr %s32, 128
          %s517 = scalar_lea.hbm %s6, %s516
          %s519 = sshll.u32 %s491, 4
          %s520 = int_to_ptr.vmem [resolvable:$true] %s519
          %522 = dma.vmem_to_hbm [thread:$0]  %s520, 128, %s517, %s488
        $region64: #{tpu_custom_call.1} parent=39 // pred_fallthru
          _
        // Predicated region
        $region65: #{tpu_custom_call.1} parent=39 // pred_check
          %p523 = pneg %p217
        $region66: #{tpu_custom_call.1} parent=39 // pred_check_branch
          %525 = sbr.rel (%p523) target = $region68
        $region67: #{tpu_custom_call.1} parent=39 // pred_region
          %s527 = ssub.s32 128, 128
          %528 = vsyncadd %s493, %s527
          %s529 = smul.addr %s32, 128
          %s530 = scalar_lea.hbm %s7, %s529
          %s532 = sshll.u32 %s496, 4
          %s533 = int_to_ptr.vmem [resolvable:$true] %s532
          %535 = dma.vmem_to_hbm [thread:$0]  %s533, 128, %s530, %s493
        $region68: #{tpu_custom_call.1} parent=39 // pred_fallthru
          _
      $region40: #{tpu_custom_call.1} parent=5 // pred_fallthru
        _
      %p536 = scmp.le.s32.totalorder 2, %s27
      // Predicated region
      $region69: #{tpu_custom_call.1} parent=5 // pred_check
        %p537 = pneg %p536
      $region70: #{tpu_custom_call.1} parent=5 // pred_check_branch
        %539 = sbr.rel (%p537) target = $region72
      $region71: #{tpu_custom_call.1} parent=5 // pred_region
        %s540 = ssub.s32 %s27, 2
        // Predicated region
        $region73: #{tpu_custom_call.1} parent=71 // pred_check
          %p541 = pneg %p171
        $region74: #{tpu_custom_call.1} parent=71 // pred_check_branch
          %543 = sbr.rel (%p541) target = $region76
        $region75: #{tpu_custom_call.1} parent=71 // pred_region
          %s544 = sand.u32 %s156, 1
          %s545 = scalar_lea.sflag [#allocation4], %s544
          %s546 = sand.u32 %s156, 1
          %s547 = smul.addr %s546, 8
          %s548 = scalar_lea.vmem [#allocation10], %s547
          %549 = dma.done %s545, 128
        $region76: #{tpu_custom_call.1} parent=71 // pred_fallthru
          _
        // Predicated region
        $region77: #{tpu_custom_call.1} parent=71 // pred_check
          %p550 = pneg %p197
        $region78: #{tpu_custom_call.1} parent=71 // pred_check_branch
          %552 = sbr.rel (%p550) target = $region80
        $region79: #{tpu_custom_call.1} parent=71 // pred_region
          %s553 = sand.u32 %s33, 1
          %s554 = scalar_lea.sflag [#allocation12], %s553
          %s555 = sand.u32 %s182, 1
          %s556 = smul.addr %s555, 8
          %s557 = scalar_lea.vmem [#allocation11], %s556
          %558 = dma.done %s554, 128
        $region80: #{tpu_custom_call.1} parent=71 // pred_fallthru
          _
        // Predicated region
        $region81: #{tpu_custom_call.1} parent=71 // pred_check
          %p559 = pneg %p223
        $region82: #{tpu_custom_call.1} parent=71 // pred_check_branch
          %561 = sbr.rel (%p559) target = $region84
        $region83: #{tpu_custom_call.1} parent=71 // pred_region
          %s562 = sand.u32 %s33, 1
          %s563 = scalar_lea.sflag [#allocation12], %s562
          %s564 = sand.u32 %s208, 1
          %s565 = smul.addr %s564, 8
          %s566 = scalar_lea.vmem [#allocation13], %s565
          %567 = dma.done %s563, 128
        $region84: #{tpu_custom_call.1} parent=71 // pred_fallthru
          _
      $region72: #{tpu_custom_call.1} parent=5 // pred_fallthru
        _
    $region6: #{tpu_custom_call.1} parent=1 // loop_footer
      %s31 = sadd.s32 1, %s27
    $region7: #{tpu_custom_call.1} parent=1 // loop_footer_branch
      %26 = sbr.rel target = $region3
    $region8: #{tpu_custom_call.1} parent=1 // loop_exit
      _
    %568 = vsyncpa [#allocation3], 1
    %s569 = scalar_lea.sflag [#allocation3], 1
    %570 = vsyncpa %s569, 1
    %571 = vsyncpa [#allocation8], 1
    %s572 = scalar_lea.sflag [#allocation8], 1
    %573 = vsyncpa %s572, 1
    %574 = vsyncpa [#allocation4], 1
    %s575 = scalar_lea.sflag [#allocation4], 1
    %576 = vsyncpa %s575, 1
    %577 = vsyncpa [#allocation12], 1
    %s578 = scalar_lea.sflag [#allocation12], 1
    %579 = vsyncpa %s578, 1
    %580 = vsyncpa [#allocation5], 1
    %s581 = scalar_lea.sflag [#allocation5], 1
    %582 = vsyncpa %s581, 1

</llo_original>
